<compile_context>
chip_gen: v7x
topology: tpu7x:2x2x1
jax: 0.10.0
libtpu: 0.0.40
codegen_flags: <defaults>
</compile_context>

<pallas_src>
import jax
import jax.numpy as jnp
from jax.experimental import pallas as pl
from jax.experimental.pallas import tpu as pltpu


def _hier_attn_row_kernel(child_ref, wc_ref, row_ref):
    """Computes the single attention-weighted child row.

    child_ref: [C, H] child embeddings (resident in VMEM)
    wc_ref:    [1, H] child half of the Linear(2H -> 1) weight
    row_ref:   [1, H] output row: softmax_c(child @ w_c) applied to child
    """
    child = child_ref[...].astype(jnp.float32)             # [C, H]
    wc = wc_ref[...].astype(jnp.float32)                    # [1, H]

    # Child attention logits: VPU multiply + lane reduce (no width-1 MXU
    # matmul, no [C,1] -> [1,C] transpose).
    logits = jnp.sum(child * wc, axis=-1, keepdims=True)    # [C, 1]

    # Numerically stable softmax over the children (sublane) axis.
    m = jnp.max(logits, axis=0, keepdims=True)               # [1, 1]
    e = jnp.exp(logits - m)                                   # [C, 1]
    denom = jnp.sum(e, axis=0, keepdims=True)                 # [1, 1]

    # Unnormalized weighted sum of child embeddings, then exact normalize.
    acc = jnp.sum(e * child, axis=0, keepdims=True)           # [1, H]
    row_ref[...] = (acc / denom).astype(row_ref.dtype)


def hierarchical_attention(parent_embeds, child_embeds, attn_weight, attn_bias):
    """
    parent_embeds: [P, H]  (only P matters: the parent score term is constant
                   along the child axis and cancels in the softmax)
    child_embeds:  [C, H]
    attn_weight:   [1, 2H] (PyTorch nn.Linear(2H, 1).weight layout)
    attn_bias:     [1]     (also cancels inside the softmax over children)
    Returns:       [P, H]  attention-weighted child embeddings
    """
    P, H = parent_embeds.shape
    C, H2 = child_embeds.shape
    assert H == H2
    assert attn_weight.shape == (1, 2 * H)
    assert attn_bias.shape == (1,)

    # Child half of the Linear(2H -> 1) weight; the parent half and the bias
    # cancel in the softmax over children (shift invariance).
    w_child = attn_weight[:, H:]                              # [1, H]

    row = pl.pallas_call(
        _hier_attn_row_kernel,
        out_shape=jax.ShapeDtypeStruct((1, H), jnp.float32),
        grid=(1,),
        in_specs=[
            pl.BlockSpec((C, H), lambda i: (0, 0)),           # child embeddings
            pl.BlockSpec((1, H), lambda i: (0, 0)),           # child weight row
        ],
        out_specs=pl.BlockSpec((1, H), lambda i: (0, 0)),
        compiler_params=pltpu.CompilerParams(
            dimension_semantics=("arbitrary",)),
    )(child_embeds, w_child)

    # Every parent row receives the same attention-weighted child embedding.
    # The [P, H] writeback is pure HBM store bandwidth; XLA emits it lane-dense
    # (no masked partial stores) and the softmax/reduction above ran only once.
    return jnp.broadcast_to(row, (P, H)).astype(parent_embeds.dtype)


def _reference(parent_embeds, child_embeds, attn_weight, attn_bias):
    # Faithful transcription of the PyTorch forward (full additive score).
    P, H = parent_embeds.shape
    C, _ = child_embeds.shape
    pe = jnp.broadcast_to(parent_embeds[:, None, :], (P, C, H))
    ce = jnp.broadcast_to(child_embeds[None, :, :], (P, C, H))
    concat = jnp.concatenate([pe, ce], axis=2).reshape(-1, 2 * H)
    scores = (concat @ attn_weight.T + attn_bias).reshape(P, C)
    weights = jax.nn.softmax(scores, axis=1)
    return weights @ child_embeds


if __name__ == "__main__":
    key = jax.random.PRNGKey(0)
    k1, k2, k3, k4 = jax.random.split(key, 4)

    hidden_dim = 64
    n_parents = 8
    n_children = 16

    parent_embeds = jax.random.normal(k1, (n_parents, hidden_dim), dtype=jnp.float32)
    child_embeds = jax.random.normal(k2, (n_children, hidden_dim), dtype=jnp.float32)

    # Deterministic synthetic init of nn.Linear(hidden_dim*2, 1) parameters.
    attn_weight = 0.1 * jax.random.normal(k3, (1, 2 * hidden_dim), dtype=jnp.float32)
    attn_bias = 0.1 * jax.random.normal(k4, (1,), dtype=jnp.float32)

    out = hierarchical_attention(parent_embeds, child_embeds, attn_weight, attn_bias)
    out = jax.block_until_ready(out)

    ref = _reference(parent_embeds, child_embeds, attn_weight, attn_bias)
    assert out.shape == (n_parents, hidden_dim)
    assert jnp.allclose(out, ref, atol=1e-5, rtol=1e-5), "mismatch vs reference"

    print("KERNEL_OK")
</pallas_src>

<mosaic_0001>
module attributes {stable_mosaic.version = 11 : i64} {
  func.func @_hier_attn_row_kernel(%arg0: i32, %arg1: memref<16x64xf32, #tpu.memory_space<vmem>>, %arg2: memref<1x64xf32, #tpu.memory_space<vmem>>, %arg3: memref<1x64xf32, #tpu.memory_space<vmem>>) attributes {dimension_semantics = [#tpu.dimension_semantics<arbitrary>], iteration_bounds = array<i64: 1>, scalar_prefetch = 0 : i64, scratch_operands = 0 : i64, tpu.core_type = #tpu.core_type<tc>, window_params = [{pipeline_mode = #tpu.pipeline_mode<synchronous>, transform_indices = @transform_0, window_bounds = array<i64: 16, 64>}, {pipeline_mode = #tpu.pipeline_mode<synchronous>, transform_indices = @transform_1, window_bounds = array<i64: 1, 64>}, {pipeline_mode = #tpu.pipeline_mode<synchronous>, transform_indices = @transform_2, window_bounds = array<i64: 1, 64>}]} {
    %c0 = arith.constant 0 : index
    %c0_0 = arith.constant 0 : index
    %0 = vector.load %arg1[%c0, %c0_0] : memref<16x64xf32, #tpu.memory_space<vmem>>, vector<16x64xf32>
    %c0_1 = arith.constant 0 : index
    %c0_2 = arith.constant 0 : index
    %1 = vector.load %arg2[%c0_1, %c0_2] : memref<1x64xf32, #tpu.memory_space<vmem>>, vector<1x64xf32>
    %2 = vector.broadcast %1 : vector<1x64xf32> to vector<16x64xf32>
    %3 = arith.mulf %0, %2 : vector<16x64xf32>
    %cst = arith.constant dense<0.000000e+00> : vector<16xf32>
    %4 = vector.multi_reduction <add>, %3, %cst [1] : vector<16x64xf32> to vector<16xf32>
    %5 = vector.shape_cast %4 : vector<16xf32> to vector<16x1xf32>
    %cst_3 = arith.constant dense<0xFF800000> : vector<1xf32>
    %6 = vector.multi_reduction <maximumf>, %5, %cst_3 [0] : vector<16x1xf32> to vector<1xf32>
    %7 = vector.shape_cast %6 : vector<1xf32> to vector<1x1xf32>
    %8 = vector.broadcast %7 : vector<1x1xf32> to vector<16x1xf32>
    %9 = arith.subf %5, %8 : vector<16x1xf32>
    %10 = math.exp %9 : vector<16x1xf32>
    %cst_4 = arith.constant dense<0.000000e+00> : vector<1xf32>
    %11 = vector.multi_reduction <add>, %10, %cst_4 [0] : vector<16x1xf32> to vector<1xf32>
    %12 = vector.shape_cast %11 : vector<1xf32> to vector<1x1xf32>
    %13 = vector.broadcast %10 : vector<16x1xf32> to vector<16x64xf32>
    %14 = arith.mulf %13, %0 : vector<16x64xf32>
    %cst_5 = arith.constant dense<0.000000e+00> : vector<64xf32>
    %15 = vector.multi_reduction <add>, %14, %cst_5 [0] : vector<16x64xf32> to vector<64xf32>
    %16 = vector.shape_cast %15 : vector<64xf32> to vector<1x64xf32>
    %17 = vector.broadcast %12 : vector<1x1xf32> to vector<1x64xf32>
    %18 = arith.divf %16, %17 : vector<1x64xf32>
    %c0_6 = arith.constant 0 : index
    %c0_7 = arith.constant 0 : index
    %19 = vector.load %arg3[%c0_6, %c0_7] : memref<1x64xf32, #tpu.memory_space<vmem>>, vector<1x64xf32>
    tpu.vector_store %arg3[%c0_6, %c0_7], %18 {strides = array<i32>} : memref<1x64xf32, #tpu.memory_space<vmem>>, vector<1x64xf32>,
    return
  }
  func.func @transform_0(%arg0: i32) -> (i32, i32) {
    %c0_i32 = arith.constant 0 : i32
    %c0_i32_0 = arith.constant 0 : i32
    %c0_i32_1 = arith.constant 0 : i32
    return %c0_i32, %c0_i32_0 : i32, i32
  }
  func.func @transform_1(%arg0: i32) -> (i32, i32) {
    %c0_i32 = arith.constant 0 : i32
    %c0_i32_0 = arith.constant 0 : i32
    %c0_i32_1 = arith.constant 0 : i32
    return %c0_i32, %c0_i32_0 : i32, i32
  }
  func.func @transform_2(%arg0: i32) -> (i32, i32) {
    %c0_i32 = arith.constant 0 : i32
    %c0_i32_0 = arith.constant 0 : i32
    %c0_i32_1 = arith.constant 0 : i32
    return %c0_i32, %c0_i32_0 : i32, i32
  }
}

</mosaic_0001>

<llo_original>
// kernel: tpu_custom_call.1
$region0: #{tpu_custom_call.1}
  #allocation0 [shape = 'u32[]', space=smem, size = 0x4, offset = 0x4, fixed_abs, tag = 'smem constant byte address 0x4 - core index']
  #allocation1 [shape = 'u32[144,128]{1,0:T(1,128)}', space=vmem, size = 0x12000, scoped, tag = 'internal scratch']
  %s0 = inlined_call_operand.hbm [shape: f32[16,64], index: 0, kind: input, shape index: {}]
  %s1 = inlined_call_operand.vmem [shape: f32[1,64], index: 1, kind: input, shape index: {}]
  %s2 = inlined_call_operand.hbm [shape: f32[1,64], index: 2, kind: output, shape index: {}]
  %s3 = sld [smem:[#allocation0]]
  $region22: #{tpu_custom_call.1} parent=0
    _
  %s5 = ssub.s32 1, %s3
  %s6 = scalar_select 0, %s5, %s3
  $region1: #{tpu_custom_call.1} parent=0
    #allocation2 [shape = 'u8[8192]{0}', space=vmem, size = 0x2000, scoped, tag = 'input window, operand 0, single buffered']
    #allocation3 [shape = 's32[1]{0}', space=sflag, size = 0x4, scoped, tag = 'scoped memory for tpu_custom_call.1']
    #allocation4 [shape = 's32[1]{0}', space=sflag, size = 0x4, scoped, tag = 'scoped memory for tpu_custom_call.1']
    #allocation5 [shape = 'u8[512]{0}', space=vmem, size = 0x400, scoped, tag = 'output window, operand 0, single buffered']
    %7 = vsyncpa [#allocation3], 0
    %8 = vsyncpa [#allocation4], 0
    // Predicated region
    $region2: #{tpu_custom_call.1} parent=1 // pred_check
      _
    $region3: #{tpu_custom_call.1} parent=1 // pred_check_branch
      %10 = sbr.rel (0) target = $region5
    $region4: #{tpu_custom_call.1} parent=1 // pred_region
      %s12 = ssub.s32 256, 256
      %13 = vsyncadd [#allocation3], %s12
      %s14 = sshll.u32 [#allocation2], 4
      %s15 = int_to_ptr.vmem [resolvable:$true] %s14
      %20 = dma.hbm_to_vmem [thread:$0]  %s0, 256, %s15, [#allocation3], 128, 128, 8
    $region5: #{tpu_custom_call.1} parent=1 // pred_fallthru
      _
    // Predicated region
    $region6: #{tpu_custom_call.1} parent=1 // pred_check
      _
    $region7: #{tpu_custom_call.1} parent=1 // pred_check_branch
      %22 = sbr.rel (0) target = $region9
    $region8: #{tpu_custom_call.1} parent=1 // pred_region
      _
    $region9: #{tpu_custom_call.1} parent=1 // pred_fallthru
      _
    // Predicated region
    $region10: #{tpu_custom_call.1} parent=1 // pred_check
      _
    $region11: #{tpu_custom_call.1} parent=1 // pred_check_branch
      %24 = sbr.rel (0) target = $region13
    $region12: #{tpu_custom_call.1} parent=1 // pred_region
      %25 = dma.done [#allocation3], 256
    $region13: #{tpu_custom_call.1} parent=1 // pred_fallthru
      _
    %v26 = vld [vmem:[#allocation2] sm:$0xff]
    %v27 = vld [vmem:[#allocation2 + $0x8] sm:$0xff]
    %v28 = vld [vmem:[%s1] sm:$0x1]
    %v30 = vlaneseq
    %v31 = vshrl.u32 %v30, 7
    %v32 = vsub.s32 0, %v31
    %v33 = vrot.slane %v28, %v32
    %v35 = vmul.f32 %v26, %v33
    %v36 = vmul.f32 %v27, %v33
    %vm37 = vcmask 523264
    %v38 = vsel %vm37, %v35, 0.0
    %39 = vadd.xlane.f32.xlu0 %v38
    %v40 = vpop.xlane.xlu0 %39
    %v41 = vsel %vm37, %v36, 0.0
    %42 = vadd.xlane.f32.xlu0 %v41
    %v43 = vpop.xlane.xlu0 %42
    %v44 = vmax.f32 %v40, %v43
    %v45 = vrot.slane %v44, 4
    %v46 = vmax.f32 %v44, %v45
    %v47 = vrot.slane %v46, 2
    %v48 = vmax.f32 %v46, %v47
    %v49 = vrot.slane %v48, 1
    %v50 = vmax.f32 %v48, %v49
    %v51 = vsub.f32 %v40, %v50
    %v52 = vsub.f32 %v43, %v50
    %v53 = vmul.f32 %v51, 1.442695
    %v54 = vpow.pop %v53
    %v55 = vmul.f32 %v52, 1.442695
    %v56 = vpow.pop %v55
    %v57 = vadd.f32 %v54, %v56
    %v58 = vrot.slane %v57, 4
    %v59 = vadd.f32 %v57, %v58
    %v60 = vrot.slane %v59, 2
    %v61 = vadd.f32 %v59, %v60
    %v62 = vrot.slane %v61, 1
    %v63 = vadd.f32 %v61, %v62
    %v64 = vmul.f32 %v54, %v26
    %v65 = vmul.f32 %v56, %v27
    %v66 = vsel %vm37, %v64, 0.0
    %v67 = vsel %vm37, %v65, 0.0
    %v68 = vadd.f32 %v66, %v67
    %v69 = vrot.slane %v68, 4
    %v70 = vadd.f32 %v68, %v69
    %v71 = vrot.slane %v70, 2
    %v72 = vadd.f32 %v70, %v71
    %v73 = vrot.slane %v72, 1
    %v74 = vadd.f32 %v72, %v73
    %v75 = vrcp.pop %v63
    %v76 = vmul.f32 %v74, %v75
    %vm77 = vcmask 516096
    %78 = vst.msk [vmem:[#allocation5] sm:$0x1] %vm77, %v76
    // Predicated region
    $region14: #{tpu_custom_call.1} parent=1 // pred_check
      _
    $region15: #{tpu_custom_call.1} parent=1 // pred_check_branch
      %80 = sbr.rel (0) target = $region17
    $region16: #{tpu_custom_call.1} parent=1 // pred_region
      %s82 = ssub.s32 16, 16
      %83 = vsyncadd [#allocation4], %s82
      %s85 = sshll.u32 [#allocation5], 4
      %s86 = int_to_ptr.vmem [resolvable:$true] %s85
      %88 = dma.vmem_to_hbm [thread:$0]  %s86, 16, %s2, [#allocation4]
    $region17: #{tpu_custom_call.1} parent=1 // pred_fallthru
      _
    // Predicated region
    $region18: #{tpu_custom_call.1} parent=1 // pred_check
      _
    $region19: #{tpu_custom_call.1} parent=1 // pred_check_branch
      %90 = sbr.rel (0) target = $region21
    $region20: #{tpu_custom_call.1} parent=1 // pred_region
      %91 = dma.done [#allocation4], 16
    $region21: #{tpu_custom_call.1} parent=1 // pred_fallthru
      _
    %92 = vsyncpa [#allocation3], 1
    %93 = vsyncpa [#allocation4], 1

</llo_original>
